<compile_context>
chip_gen: v6e
topology: v6e:2x2x1
jax: 0.10.0
libtpu: 0.0.40
codegen_flags: <defaults>
</compile_context>

<pallas_src>
import jax
import jax.numpy as jnp
from jax.experimental import pallas as pl
from jax.experimental.pallas import tpu as pltpu

_LANE = 128
_SUBLANE = 8
_MAX_COLS = 1024                       # lane-dense slab width target
_TARGET_TILE_BYTES = 2 * 1024 * 1024   # ~2 MiB tile: ~85% of HBM roofline,
                                       # safe on v7x (64 MiB VMEM) with
                                       # default double buffering.


def _copy_kernel(x_ref, o_ref):
    # Element-wise pass-through of the current (block_rows, cols) tile.
    o_ref[...] = x_ref[...]


def _choose_2d_view(total_elems: int, elem_bytes: int):
    """Pick a lane-dense (rows, cols) view and a row-tile size."""
    # Largest power-of-two multiple of 128 that divides the element count,
    # capped at 1024 lanes -> unmasked full-lane stores.
    cols = _LANE
    while cols * 2 <= _MAX_COLS and total_elems % (cols * 2) == 0:
        cols *= 2
    rows = total_elems // cols

    # Row-tile: multiple of 8 sublanes, sized so one tile is ~2 MiB.
    max_rows_per_tile = max(_SUBLANE, _TARGET_TILE_BYTES // (cols * elem_bytes))
    max_rows_per_tile = (max_rows_per_tile // _SUBLANE) * _SUBLANE
    block_rows = rows if rows <= max_rows_per_tile else max_rows_per_tile
    return rows, cols, block_rows


def slide_image_segmentation_forward(x: jax.Array) -> jax.Array:
    """Forward pass of SlideImageSegmentationModel (identity) as a Pallas kernel.

    Args:
        x: NCHW tensor of shape (N, C, H, W) (any shape/dtype works).

    Returns:
        Tensor identical to `x` (same shape, same dtype).
    """
    # NOTE: under jit the optimal identity is `return x` (zero HBM traffic);
    # the Pallas copy below is kept because the exercise asks for a kernel.
    orig_shape = x.shape
    total = x.size
    elem_bytes = jnp.dtype(x.dtype).itemsize

    if total == 0:
        return x

    if total % _LANE == 0:
        rows, cols, block_rows = _choose_2d_view(total, elem_bytes)
    else:
        # Odd total element count: single full-extent block (always satisfies
        # the (8, 128) block rule because block dims equal the array dims).
        rows, cols, block_rows = 1, total, 1

    x2d = x.reshape(rows, cols)
    grid = (pl.cdiv(rows, block_rows),)

    out2d = pl.pallas_call(
        _copy_kernel,
        out_shape=jax.ShapeDtypeStruct((rows, cols), x.dtype),
        grid_spec=pltpu.PrefetchScalarGridSpec(
            num_scalar_prefetch=0,
            grid=grid,
            in_specs=[pl.BlockSpec((block_rows, cols), lambda i: (i, 0))],
            out_specs=pl.BlockSpec((block_rows, cols), lambda i: (i, 0)),
        ),
        compiler_params=pltpu.CompilerParams(
            dimension_semantics=("parallel",),  # shardable across v7x's 2 TCs
        ),
        # Reuse the input HBM buffer for the output (no extra allocation;
        # with donation XLA can elide the copy entirely).
        input_output_aliases={0: 0},
        # Mem-bound hint for the XLA scheduler: pure copy, 2x array bytes.
        cost_estimate=pl.CostEstimate(
            flops=0,
            transcendentals=0,
            bytes_accessed=2 * total * elem_bytes,
        ),
    )(x2d)

    return out2d.reshape(orig_shape)


# TODO(synk): the reference __init__ declares no layers ("TO BE U-NET"), so
# there are no parameters; if/when U-Net blocks are added, this wrapper is
# where conv / upsample Pallas kernels would be wired in.


if __name__ == "__main__":
    key = jax.random.PRNGKey(0)
    # Small NCHW input consistent with an image-segmentation model stub.
    x = jax.random.normal(key, (2, 4, 16, 16), dtype=jnp.float32)

    y = slide_image_segmentation_forward(x)
    y = jax.block_until_ready(y)

    assert y.shape == x.shape and y.dtype == x.dtype
    assert bool(jnp.array_equal(y, x))

    print("KERNEL_OK")
</pallas_src>

<mosaic_0001>
module attributes {stable_mosaic.version = 11 : i64} {
  func.func @_copy_kernel(%arg0: i32, %arg1: memref<2x1024xf32, #tpu.memory_space<vmem>>, %arg2: memref<2x1024xf32, #tpu.memory_space<vmem>>) attributes {dimension_semantics = [#tpu.dimension_semantics<parallel>], iteration_bounds = array<i64: 1>, scalar_prefetch = 0 : i64, scratch_operands = 0 : i64, tpu.core_type = #tpu.core_type<tc>, window_params = [{transform_indices = @transform_0, window_bounds = array<i64: 2, 1024>}, {transform_indices = @transform_1, window_bounds = array<i64: 2, 1024>}]} {
    %c0 = arith.constant 0 : index
    %c0_0 = arith.constant 0 : index
    %0 = vector.load %arg1[%c0, %c0_0] : memref<2x1024xf32, #tpu.memory_space<vmem>>, vector<2x1024xf32>
    %c0_1 = arith.constant 0 : index
    %c0_2 = arith.constant 0 : index
    %1 = vector.load %arg2[%c0_1, %c0_2] : memref<2x1024xf32, #tpu.memory_space<vmem>>, vector<2x1024xf32>
    tpu.vector_store %arg2[%c0_1, %c0_2], %0 {strides = array<i32>} : memref<2x1024xf32, #tpu.memory_space<vmem>>, vector<2x1024xf32>,
    return
  }
  func.func @transform_0(%arg0: i32) -> (i32, i32) {
    %c0_i32 = arith.constant 0 : i32
    %c0_i32_0 = arith.constant 0 : i32
    return %arg0, %c0_i32 : i32, i32
  }
  func.func @transform_1(%arg0: i32) -> (i32, i32) {
    %c0_i32 = arith.constant 0 : i32
    %c0_i32_0 = arith.constant 0 : i32
    return %arg0, %c0_i32 : i32, i32
  }
}

</mosaic_0001>

<llo_original>
// kernel: tpu_custom_call.1
$region0: #{tpu_custom_call.1}
  #allocation0 [shape = 'u32[]', space=smem, size = 0x4, offset = 0x4, fixed_abs, tag = 'smem constant byte address 0x4 - core index']
  #allocation1 [shape = 'u32[144,128]{1,0:T(1,128)}', space=vmem, size = 0x12000, scoped, tag = 'internal scratch']
  %s0 = inlined_call_operand.hbm [shape: f32[2,1024], index: 0, kind: input, shape index: {}, may-alias: {0,1}]
  %s1 = inlined_call_operand.hbm [shape: f32[2,1024], index: 1, kind: output, shape index: {}, may-alias: {0,1}]
  %s2 = sld [smem:[#allocation0]]
  $region18: #{tpu_custom_call.1} parent=0
    _
  %s4 = ssub.s32 1, %s2
  %s5 = scalar_select 0, %s4, %s2
  $region1: #{tpu_custom_call.1} parent=0
    #allocation2 [shape = 'u8[8192]{0}', space=vmem, size = 0x2000, scoped, tag = 'input window, operand 0, single buffered']
    #allocation3 [shape = 's32[1]{0}', space=sflag, size = 0x4, scoped, tag = 'scoped memory for tpu_custom_call.1']
    #allocation4 [shape = 's32[1]{0}', space=sflag, size = 0x4, scoped, tag = 'scoped memory for tpu_custom_call.1']
    #allocation5 [shape = 'u8[8192]{0}', space=vmem, size = 0x2000, scoped, tag = 'output window, operand 0, single buffered']
    %6 = vsyncpa [#allocation3], 0
    %7 = vsyncpa [#allocation4], 0
    // Predicated region
    $region2: #{tpu_custom_call.1} parent=1 // pred_check
      _
    $region3: #{tpu_custom_call.1} parent=1 // pred_check_branch
      %9 = sbr.rel (0) target = $region5
    $region4: #{tpu_custom_call.1} parent=1 // pred_region
      %s11 = ssub.s32 256, 256
      %12 = vsyncadd [#allocation3], %s11
      %s14 = sshll.u32 [#allocation2], 4
      %s15 = int_to_ptr.vmem [resolvable:$true] %s14
      %17 = dma.hbm_to_vmem [thread:$0]  %s0, 256, %s15, [#allocation3]
    $region5: #{tpu_custom_call.1} parent=1 // pred_fallthru
      _
    // Predicated region
    $region6: #{tpu_custom_call.1} parent=1 // pred_check
      _
    $region7: #{tpu_custom_call.1} parent=1 // pred_check_branch
      %19 = sbr.rel (0) target = $region9
    $region8: #{tpu_custom_call.1} parent=1 // pred_region
      %20 = dma.done [#allocation3], 256
    $region9: #{tpu_custom_call.1} parent=1 // pred_fallthru
      _
    %v21 = vld [vmem:[#allocation2] sm:$0xff]
    %v22 = vld [vmem:[#allocation2 + $0x8] sm:$0xff]
    %23 = vst [vmem:[#allocation5] sm:$0xff] %v21
    %24 = vst [vmem:[#allocation5 + $0x8] sm:$0xff] %v22
    // Predicated region
    $region10: #{tpu_custom_call.1} parent=1 // pred_check
      _
    $region11: #{tpu_custom_call.1} parent=1 // pred_check_branch
      %26 = sbr.rel (0) target = $region13
    $region12: #{tpu_custom_call.1} parent=1 // pred_region
      %s28 = ssub.s32 256, 256
      %29 = vsyncadd [#allocation4], %s28
      %s31 = sshll.u32 [#allocation5], 4
      %s32 = int_to_ptr.vmem [resolvable:$true] %s31
      %34 = dma.vmem_to_hbm [thread:$0]  %s32, 256, %s1, [#allocation4]
    $region13: #{tpu_custom_call.1} parent=1 // pred_fallthru
      _
    // Predicated region
    $region14: #{tpu_custom_call.1} parent=1 // pred_check
      _
    $region15: #{tpu_custom_call.1} parent=1 // pred_check_branch
      %36 = sbr.rel (0) target = $region17
    $region16: #{tpu_custom_call.1} parent=1 // pred_region
      %37 = dma.done [#allocation4], 256
    $region17: #{tpu_custom_call.1} parent=1 // pred_fallthru
      _
    %38 = vsyncpa [#allocation3], 1
    %39 = vsyncpa [#allocation4], 1

</llo_original>
